<compile_context>
chip_gen: v7x
topology: tpu7x:2x2x1
jax: 0.10.0
libtpu: 0.0.40
codegen_flags: <defaults>
</compile_context>

<pallas_src>
import math

import jax
import jax.numpy as jnp
from jax.experimental import pallas as pl
from jax.experimental.pallas import tpu as pltpu

N = 32            # DFT length from the module annotation: ([32], float32)
LANE_BLOCK = 128  # batch tile on the lane (last) axis


def dft_kernel(m_ref, x_ref, o_ref):
    # m_ref: (N, N) f32   -- constant real DFT matrix (hoisted, resident).
    # x_ref: (N, 128) f32 -- batch of column vectors, lane-dense.
    # o_ref: (N, 128) f32 -- Y = M @ X.
    o_ref[...] = jnp.dot(m_ref[...], x_ref[...],
                         preferred_element_type=jnp.float32)


def dft_matrix(n: int) -> jax.Array:
    # M[k, m] = exp(-2*pi*k*m/n), real-valued f32 -- exactly the reference math.
    idx = jnp.arange(n, dtype=jnp.float32)
    return jnp.exp(-2.0 * math.pi * idx[:, None] * idx[None, :] / float(n))


def dft_pallas_batched(m: jax.Array, x_cols: jax.Array) -> jax.Array:
    """Y[N, B] = M[N, N] @ X[N, B]; B must be a multiple of LANE_BLOCK."""
    n, b = x_cols.shape
    assert m.shape == (n, n) and b % LANE_BLOCK == 0
    grid = (b // LANE_BLOCK,)
    cost = pl.CostEstimate(
        flops=2 * n * n * b,
        transcendentals=0,
        bytes_accessed=4 * (n * n + 2 * n * b),
    )
    return pl.pallas_call(
        dft_kernel,
        out_shape=jax.ShapeDtypeStruct((n, b), jnp.float32),
        grid_spec=pltpu.PrefetchScalarGridSpec(
            num_scalar_prefetch=0,
            grid=grid,
            in_specs=[
                pl.BlockSpec((n, n), lambda j: (0, 0)),           # M stays resident
                pl.BlockSpec((n, LANE_BLOCK), lambda j: (0, j)),  # X tile
            ],
            out_specs=pl.BlockSpec((n, LANE_BLOCK), lambda j: (0, j)),
        ),
        compiler_params=pltpu.CompilerParams(
            # Independent batch tiles -> megacore sharding on v7x, neutral elsewhere.
            dimension_semantics=("parallel",),
        ),
        cost_estimate=cost,
    )(m, x_cols)


@jax.jit
def dft_forward(x: jax.Array) -> jax.Array:
    """Matches DftModule.forward: x of shape (32,) f32 -> (32,) f32."""
    m = dft_matrix(N)  # built once in the wrapper (constant), not in the kernel
    # Place the single vector in column 0 of a lane-dense (N, 128) slab; at this
    # size the call is launch-overhead bound, so the padded columns are free.
    x_cols = jnp.zeros((N, LANE_BLOCK), jnp.float32).at[:, 0].set(
        x.astype(jnp.float32))
    y_cols = dft_pallas_batched(m, x_cols)
    return y_cols[:, 0]


@jax.jit
def dft_forward_batch(xb: jax.Array) -> jax.Array:
    """Batched entry point: xb (B, 32) -> (B, 32); amortizes dispatch overhead."""
    b = xb.shape[0]
    m = dft_matrix(N)
    b_pad = ((b + LANE_BLOCK - 1) // LANE_BLOCK) * LANE_BLOCK
    x_cols = jnp.zeros((N, b_pad), jnp.float32).at[:, :b].set(
        xb.astype(jnp.float32).T)
    y_cols = dft_pallas_batched(m, x_cols)
    return y_cols[:, :b].T


def dft_reference(x: jax.Array) -> jax.Array:
    n = jnp.arange(N, dtype=jnp.float32)
    k = n.reshape(N, 1)
    m = jnp.exp(-2.0 * math.pi * k * n / N)
    return m @ x.astype(jnp.float32)


if __name__ == "__main__":
    key = jax.random.PRNGKey(0)
    # Single-vector input exactly as the module annotation: [32] float32.
    x = jax.random.normal(key, (N,), dtype=jnp.float32)

    y = dft_forward(x)
    jax.block_until_ready(y)

    y_ref = dft_reference(x)
    assert y.shape == (N,) and y.dtype == jnp.float32
    err = float(jnp.max(jnp.abs(y - y_ref)))
    scale = float(jnp.max(jnp.abs(y_ref))) + 1e-6
    assert err <= 1e-4 * scale, f"single-vector mismatch: abs_err={err}"

    # Also exercise the batched lane-dense path (the perf-relevant shape).
    xb = jax.random.normal(jax.random.PRNGKey(1), (256, N), dtype=jnp.float32)
    yb = dft_forward_batch(xb)
    jax.block_until_ready(yb)
    m_ref = dft_matrix(N)
    yb_ref = jnp.einsum("kn,bn->bk", m_ref, xb)
    berr = float(jnp.max(jnp.abs(yb - yb_ref)))
    bscale = float(jnp.max(jnp.abs(yb_ref))) + 1e-6
    assert berr <= 1e-4 * bscale, f"batched mismatch: abs_err={berr}"

    print("KERNEL_OK")
</pallas_src>

<mosaic_0001>
module attributes {stable_mosaic.version = 11 : i64} {
  func.func @dft_kernel(%arg0: i32, %arg1: memref<32x32xf32, #tpu.memory_space<vmem>>, %arg2: memref<32x128xf32, #tpu.memory_space<vmem>>, %arg3: memref<32x128xf32, #tpu.memory_space<vmem>>) attributes {dimension_semantics = [#tpu.dimension_semantics<parallel>], iteration_bounds = array<i64: 1>, scalar_prefetch = 0 : i64, scratch_operands = 0 : i64, tpu.core_type = #tpu.core_type<tc>, window_params = [{pipeline_mode = #tpu.pipeline_mode<synchronous>, transform_indices = @transform_0, window_bounds = array<i64: 32, 32>}, {transform_indices = @transform_1, window_bounds = array<i64: 32, 128>}, {transform_indices = @transform_2, window_bounds = array<i64: 32, 128>}]} {
    %c0 = arith.constant 0 : index
    %c0_0 = arith.constant 0 : index
    %0 = vector.load %arg1[%c0, %c0_0] : memref<32x32xf32, #tpu.memory_space<vmem>>, vector<32x32xf32>
    %c0_1 = arith.constant 0 : index
    %c0_2 = arith.constant 0 : index
    %1 = vector.load %arg2[%c0_1, %c0_2] : memref<32x128xf32, #tpu.memory_space<vmem>>, vector<32x128xf32>
    %cst = arith.constant dense<0.000000e+00> : vector<32x128xf32>
    %2 = tpu.matmul %0, %1, %cst {dimension_numbers = #tpu.dot_dimension_numbers<[1], [0], [0], [1], [0, 0, 1, 1], [], []>} : vector<32x32xf32>, vector<32x128xf32>, vector<32x128xf32> -> vector<32x128xf32>
    %c0_3 = arith.constant 0 : index
    %c0_4 = arith.constant 0 : index
    %3 = vector.load %arg3[%c0_3, %c0_4] : memref<32x128xf32, #tpu.memory_space<vmem>>, vector<32x128xf32>
    tpu.vector_store %arg3[%c0_3, %c0_4], %2 {strides = array<i32>} : memref<32x128xf32, #tpu.memory_space<vmem>>, vector<32x128xf32>,
    return
  }
  func.func @transform_0(%arg0: i32) -> (i32, i32) {
    %c0_i32 = arith.constant 0 : i32
    %c0_i32_0 = arith.constant 0 : i32
    %c0_i32_1 = arith.constant 0 : i32
    return %c0_i32, %c0_i32_0 : i32, i32
  }
  func.func @transform_1(%arg0: i32) -> (i32, i32) {
    %c0_i32 = arith.constant 0 : i32
    %c0_i32_0 = arith.constant 0 : i32
    return %c0_i32, %arg0 : i32, i32
  }
  func.func @transform_2(%arg0: i32) -> (i32, i32) {
    %c0_i32 = arith.constant 0 : i32
    %c0_i32_0 = arith.constant 0 : i32
    return %c0_i32, %arg0 : i32, i32
  }
}

</mosaic_0001>

<llo_original>
// kernel: dft_forward.1
$region0: #{dft_forward.1}
  #allocation0 [shape = 'u32[]', space=smem, size = 0x4, offset = 0x4, fixed_abs, tag = 'smem constant byte address 0x4 - core index']
  #allocation1 [shape = 'u32[144,128]{1,0:T(1,128)}', space=vmem, size = 0x12000, scoped, tag = 'internal scratch']
  %s0 = inlined_call_operand.vmem [shape: f32[32,32], index: 0, kind: input, shape index: {}]
  %s1 = inlined_call_operand.vmem [shape: f32[32,128], index: 1, kind: input, shape index: {}]
  %s2 = inlined_call_operand.vmem [shape: f32[32,128], index: 2, kind: output, shape index: {}]
  %s3 = sld [smem:[#allocation0]]
  $region18: #{dft_forward.1} parent=0
    _
  %s5 = ssub.s32 1, %s3
  %s6 = scalar_select 0, %s5, %s3
  // Predicated region
  $region2: #{dft_forward.1} parent=0 // pred_check
    _
  $region3: #{dft_forward.1} parent=0 // pred_check_branch
    %8 = sbr.rel (0) target = $region5
  $region4: #{dft_forward.1} parent=0 // pred_region
    _
  $region5: #{dft_forward.1} parent=0 // pred_fallthru
    _
  // Predicated region
  $region6: #{dft_forward.1} parent=0 // pred_check
    _
  $region7: #{dft_forward.1} parent=0 // pred_check_branch
    %10 = sbr.rel (0) target = $region9
  $region8: #{dft_forward.1} parent=0 // pred_region
    _
  $region9: #{dft_forward.1} parent=0 // pred_fallthru
    _
  %v11 = vld [vmem:[%s0] sm:$0xff]
  %v12 = vld [vmem:[%s0 + $0x8] sm:$0xff]
  %v13 = vld [vmem:[%s0 + $0x10] sm:$0xff]
  %v14 = vld [vmem:[%s0 + $0x18] sm:$0xff]
  %v15 = vld [vmem:[%s1] sm:$0xff]
  %v16 = vld [vmem:[%s1 + $0x8] sm:$0xff]
  %v17 = vld [vmem:[%s1 + $0x10] sm:$0xff]
  %v18 = vld [vmem:[%s1 + $0x18] sm:$0xff]
  %vm19 = vcmask 261120
  %v21 = vsel %vm19, %v11, 0
  %v24 = vsel %vm19, %v12, 0
  %v27 = vsel %vm19, %v13, 0
  %v30 = vsel %vm19, %v14, 0
  %32 = vmatprep.subr.mxu0 0.0
  %33 = vmatpush1.msra.mxu0 %v15
  %34 = vmatprep.subr.mxu0 0.0
  %35 = vmatpush1.msra.mxu0 %v16
  %36 = vmatprep.subr.mxu0 0.0
  %37 = vmatpush1.msra.mxu0 %v17
  %38 = vmatprep.subr.mxu0 0.0
  %39 = vmatpush1.msra.mxu0 %v18
  %40 = vmatprep.subr.mxu0 0.0
  %41 = vmatpush1.msra.mxu0 0.0
  %42 = vmatprep.subr.mxu0 0.0
  %43 = vmatpush1.msra.mxu0 0.0
  %44 = vmatprep.subr.mxu0 0.0
  %45 = vmatpush1.msra.mxu0 0.0
  %46 = vmatprep.subr.mxu0 0.0
  %47 = vmatpush1.msra.mxu0 0.0
  %48 = vmatprep.subr.mxu0 0.0
  %49 = vmatpush1.msra.mxu0 0.0
  %50 = vmatprep.subr.mxu0 0.0
  %51 = vmatpush1.msra.mxu0 0.0
  %52 = vmatprep.subr.mxu0 0.0
  %53 = vmatpush1.msra.mxu0 0.0
  %54 = vmatprep.subr.mxu0 0.0
  %55 = vmatpush1.msra.mxu0 0.0
  %56 = vmatprep.subr.mxu0 0.0
  %57 = vmatpush1.msra.mxu0 0.0
  %58 = vmatprep.subr.mxu0 0.0
  %59 = vmatpush1.msra.mxu0 0.0
  %60 = vmatprep.subr.mxu0 0.0
  %61 = vmatpush1.msra.mxu0 0.0
  %62 = vmatprep.subr.mxu0 0.0
  %63 = vmatpush1.msra.mxu0 0.0
  %64 = vmatprep.subr.mxu0 0.0
  %65 = vmatpush1.msra.mxu0 0.0
  %66 = vmatprep.subr.mxu0 0.0
  %67 = vmatpush1.msra.mxu0 0.0
  %68 = vmatprep.subr.mxu0 0.0
  %69 = vmatpush1.msra.mxu0 0.0
  %70 = vmatprep.subr.mxu0 0.0
  %71 = vmatpush1.msra.mxu0 0.0
  %72 = vmatprep.subr.mxu0 0.0
  %73 = vmatpush1.msra.mxu0 0.0
  %74 = vmatprep.subr.mxu0 0.0
  %75 = vmatpush1.msra.mxu0 0.0
  %76 = vmatprep.subr.mxu0 0.0
  %77 = vmatpush1.msra.mxu0 0.0
  %78 = vmatprep.subr.mxu0 0.0
  %79 = vmatpush1.msra.mxu0 0.0
  %80 = vmatprep.subr.mxu0 0.0
  %81 = vmatpush1.msra.mxu0 0.0
  %82 = vmatprep.subr.mxu0 0.0
  %83 = vmatpush1.msra.mxu0 0.0
  %84 = vmatprep.subr.mxu0 0.0
  %85 = vmatpush1.msra.mxu0 0.0
  %86 = vmatprep.subr.mxu0 0.0
  %87 = vmatpush1.msra.mxu0 0.0
  %88 = vmatprep.subr.mxu0 0.0
  %89 = vmatpush1.msra.mxu0 0.0
  %90 = vmatprep.subr.mxu0 0.0
  %91 = vmatpush1.msra.mxu0 0.0
  %92 = vmatprep.subr.mxu0 0.0
  %93 = vmatpush1.msra.mxu0 0.0
  %94 = vmatprep.subr.mxu0 0.0
  %95 = vmatpush1.msra.mxu0 0.0
  %96 = vmatprep.mubr.f32.mxu0 0.0
  %97 = vmatmul.mubr.f32.gmra.mrb[0].mxu0 %v21
  %v98 = vpop.f32.mrb[0].mxu0
  %v99 = vadd.f32 0.0, %v98
  %v100 = vpop.f32.mrb[0].mxu0
  %101 = vmatprep.mubr.f32.mxu0 0.0
  %102 = vmatmul.mubr.f32.gmra.mrb[0].mxu0 %v24
  %v103 = vpop.f32.mrb[0].mxu0
  %v104 = vadd.f32 0.0, %v103
  %v105 = vpop.f32.mrb[0].mxu0
  %106 = vmatprep.mubr.f32.mxu0 0.0
  %107 = vmatmul.mubr.f32.gmra.mrb[0].mxu0 %v27
  %v108 = vpop.f32.mrb[0].mxu0
  %v109 = vadd.f32 0.0, %v108
  %v110 = vpop.f32.mrb[0].mxu0
  %111 = vmatprep.mubr.f32.mxu0 0.0
  %112 = vmatmul.mubr.f32.gmra.mrb[0].mxu0 %v30
  %v113 = vpop.f32.mrb[0].mxu0
  %v114 = vadd.f32 0.0, %v113
  %v115 = vpop.f32.mrb[0].mxu0
  %116 = vdwg.mxu0
  %117 = vst [vmem:[%s2] sm:$0xff] %v99
  %118 = vst [vmem:[%s2 + $0x8] sm:$0xff] %v104
  %119 = vst [vmem:[%s2 + $0x10] sm:$0xff] %v109
  %120 = vst [vmem:[%s2 + $0x18] sm:$0xff] %v114
  // Predicated region
  $region10: #{dft_forward.1} parent=0 // pred_check
    _
  $region11: #{dft_forward.1} parent=0 // pred_check_branch
    %122 = sbr.rel (0) target = $region13
  $region12: #{dft_forward.1} parent=0 // pred_region
    _
  $region13: #{dft_forward.1} parent=0 // pred_fallthru
    _
  // Predicated region
  $region14: #{dft_forward.1} parent=0 // pred_check
    _
  $region15: #{dft_forward.1} parent=0 // pred_check_branch
    %124 = sbr.rel (0) target = $region17
  $region16: #{dft_forward.1} parent=0 // pred_region
    _
  $region17: #{dft_forward.1} parent=0 // pred_fallthru
    _

</llo_original>
